<compile_context>
chip_gen: v7x
topology: tpu7x:2x2x1
jax: 0.10.0
libtpu: 0.0.40
codegen_flags: <defaults>
</compile_context>

<pallas_src>
import math
from math import floor

import jax
import jax.numpy as jnp
from jax.experimental import pallas as pl
from jax.experimental.pallas import tpu as pltpu


def _mlp_kernel(x_ref, w1_ref, b1_ref, w2_ref, b2_ref, o_ref):
    # x_ref:  (TM, Din_f)    batch tile (folded rows)
    # w1_ref: (Din_f, H_f)   block-diagonal replicated W1 (resident)
    # b1_ref: (1, H_f)
    # w2_ref: (H_f, Dout_f)  block-diagonal replicated W2 (resident)
    # b2_ref: (1, Dout_f)    Dout_f is a multiple of 128 -> lane-dense stores
    # o_ref:  (TM, Dout_f)

    # Layer 1: Linear + ReLU (MXU matmul, f32 accumulation)
    h = jnp.dot(x_ref[...], w1_ref[...], preferred_element_type=jnp.float32)
    h = jnp.maximum(h + b1_ref[...], 0.0)

    # Dropout (p=0.2) is identity in eval mode.

    # Layer 2: Linear + Softplus (numerically stable form)
    z = jnp.dot(h, w2_ref[...], preferred_element_type=jnp.float32)
    z = z + b2_ref[...]
    sp = jnp.maximum(z, 0.0) + jnp.log1p(jnp.exp(-jnp.abs(z)))

    o_ref[...] = sp.astype(o_ref.dtype)


def neural_network_forward(x, w1, b1, w2, b2, *, max_row_tile=512):
    """x: (B, D_in) f32; w1: (D_in, H); b1: (H,); w2: (H, D_out); b2: (D_out,)."""
    B, D_in = x.shape
    H = w1.shape[1]
    D_out = w2.shape[1]

    # ---- Fold factor so the stored last dim is a multiple of 128 (lane-dense).
    fold = 128 // math.gcd(D_out, 128)
    if fold > 8:          # degenerate D_out -> fall back to unfolded layout
        fold = 1
    Din_f, H_f, Dout_f = fold * D_in, fold * H, fold * D_out

    # ---- Row tiling in folded-row space: big tiles, but >=2 parallel grid
    #      steps when possible (v7x has 2 TensorCores).
    rows = pl.cdiv(B, fold)
    tm = min(max_row_tile, rows)
    if rows >= 16:
        tm = min(tm, pl.cdiv(rows, 2))
    tm = max(8, (tm // 8) * 8)            # sublane-aligned row tile
    grid_rows = pl.cdiv(rows, tm)
    rows_pad = grid_rows * tm
    B_pad = rows_pad * fold

    # ---- Pad batch (zeros) and fold `fold` consecutive rows into one row.
    if B_pad != B:
        x = jnp.pad(x, ((0, B_pad - B), (0, 0)))
    x_f = x.reshape(rows_pad, Din_f)

    # ---- Replicate the sub-net `fold` times as block-diagonal weights.
    eye = jnp.eye(fold, dtype=w1.dtype)
    w1_f = jnp.kron(eye, w1)                      # (Din_f, H_f)
    w2_f = jnp.kron(eye, w2)                      # (H_f, Dout_f)
    b1_f = jnp.tile(b1, fold).reshape(1, H_f)
    b2_f = jnp.tile(b2, fold).reshape(1, Dout_f)

    out_f = pl.pallas_call(
        _mlp_kernel,
        out_shape=jax.ShapeDtypeStruct((rows_pad, Dout_f), x.dtype),
        grid_spec=pltpu.PrefetchScalarGridSpec(
            num_scalar_prefetch=0,
            grid=(grid_rows,),
            in_specs=[
                pl.BlockSpec((tm, Din_f), lambda i: (i, 0)),     # batch tile
                pl.BlockSpec((Din_f, H_f), lambda i: (0, 0)),    # full W1 (bd)
                pl.BlockSpec((1, H_f), lambda i: (0, 0)),        # b1
                pl.BlockSpec((H_f, Dout_f), lambda i: (0, 0)),   # full W2 (bd)
                pl.BlockSpec((1, Dout_f), lambda i: (0, 0)),     # b2
            ],
            out_specs=pl.BlockSpec((tm, Dout_f), lambda i: (i, 0)),
        ),
        compiler_params=pltpu.CompilerParams(
            dimension_semantics=("parallel",),
        ),
    )(x_f, w1_f, b1_f, w2_f, b2_f)

    # Un-fold back to (B, D_out) and strip padding.
    return out_f.reshape(B_pad, D_out)[:B]


def _reference(x, w1, b1, w2, b2):
    h = jnp.maximum(x @ w1 + b1, 0.0)
    z = h @ w2 + b2
    return jnp.maximum(z, 0.0) + jnp.log1p(jnp.exp(-jnp.abs(z)))


if __name__ == "__main__":
    # Module hyper-parameters (small, consistent with DeepImpute usage).
    inputdim = 48
    sub_outputdim = 64
    hidden_dim = floor(sub_outputdim / 2)   # default: 32

    key = jax.random.PRNGKey(0)
    kx, kw1, kb1, kw2, kb2 = jax.random.split(key, 5)

    # nn.Linear-style U(-1/sqrt(fan_in), 1/sqrt(fan_in)) init.
    lim1 = 1.0 / jnp.sqrt(jnp.float32(inputdim))
    lim2 = 1.0 / jnp.sqrt(jnp.float32(hidden_dim))
    w1 = jax.random.uniform(kw1, (inputdim, hidden_dim), jnp.float32, -lim1, lim1)
    b1 = jax.random.uniform(kb1, (hidden_dim,), jnp.float32, -lim1, lim1)
    w2 = jax.random.uniform(kw2, (hidden_dim, sub_outputdim), jnp.float32, -lim2, lim2)
    b2 = jax.random.uniform(kb2, (sub_outputdim,), jnp.float32, -lim2, lim2)

    # Main check: batch divisible by the fold/tile (B=256).
    batch = 256
    x = jax.random.normal(kx, (batch, inputdim), jnp.float32)
    out = jax.block_until_ready(neural_network_forward(x, w1, b1, w2, b2))
    ref = _reference(x, w1, b1, w2, b2)
    assert out.shape == (batch, sub_outputdim)
    assert jnp.allclose(out, ref, atol=1e-5, rtol=1e-5), "mismatch vs JAX reference (B=256)"

    # Secondary check: ragged batch exercising the padding path.
    batch2 = 200
    x2 = jax.random.normal(jax.random.fold_in(kx, 1), (batch2, inputdim), jnp.float32)
    out2 = jax.block_until_ready(neural_network_forward(x2, w1, b1, w2, b2))
    ref2 = _reference(x2, w1, b1, w2, b2)
    assert out2.shape == (batch2, sub_outputdim)
    assert jnp.allclose(out2, ref2, atol=1e-5, rtol=1e-5), "mismatch vs JAX reference (B=200)"

    print("KERNEL_OK")
</pallas_src>

<mosaic_0001>
module attributes {stable_mosaic.version = 11 : i64} {
  func.func @_mlp_kernel(%arg0: i32, %arg1: memref<64x96xf32, #tpu.memory_space<vmem>>, %arg2: memref<96x64xf32, #tpu.memory_space<vmem>>, %arg3: memref<1x64xf32, #tpu.memory_space<vmem>>, %arg4: memref<64x128xf32, #tpu.memory_space<vmem>>, %arg5: memref<1x128xf32, #tpu.memory_space<vmem>>, %arg6: memref<64x128xf32, #tpu.memory_space<vmem>>) attributes {dimension_semantics = [#tpu.dimension_semantics<parallel>], iteration_bounds = array<i64: 2>, scalar_prefetch = 0 : i64, scratch_operands = 0 : i64, tpu.core_type = #tpu.core_type<tc>, window_params = [{transform_indices = @transform_0, window_bounds = array<i64: 64, 96>}, {pipeline_mode = #tpu.pipeline_mode<synchronous>, transform_indices = @transform_1, window_bounds = array<i64: 96, 64>}, {pipeline_mode = #tpu.pipeline_mode<synchronous>, transform_indices = @transform_2, window_bounds = array<i64: 1, 64>}, {pipeline_mode = #tpu.pipeline_mode<synchronous>, transform_indices = @transform_3, window_bounds = array<i64: 64, 128>}, {pipeline_mode = #tpu.pipeline_mode<synchronous>, transform_indices = @transform_4, window_bounds = array<i64: 1, 128>}, {transform_indices = @transform_5, window_bounds = array<i64: 64, 128>}]} {
    %c0 = arith.constant 0 : index
    %c0_0 = arith.constant 0 : index
    %0 = vector.load %arg1[%c0, %c0_0] : memref<64x96xf32, #tpu.memory_space<vmem>>, vector<64x96xf32>
    %c0_1 = arith.constant 0 : index
    %c0_2 = arith.constant 0 : index
    %1 = vector.load %arg2[%c0_1, %c0_2] : memref<96x64xf32, #tpu.memory_space<vmem>>, vector<96x64xf32>
    %cst = arith.constant dense<0.000000e+00> : vector<64x64xf32>
    %2 = tpu.matmul %0, %1, %cst {dimension_numbers = #tpu.dot_dimension_numbers<[1], [0], [0], [1], [0, 0, 1, 1], [], []>} : vector<64x96xf32>, vector<96x64xf32>, vector<64x64xf32> -> vector<64x64xf32>
    %c0_3 = arith.constant 0 : index
    %c0_4 = arith.constant 0 : index
    %3 = vector.load %arg3[%c0_3, %c0_4] : memref<1x64xf32, #tpu.memory_space<vmem>>, vector<1x64xf32>
    %4 = vector.broadcast %3 : vector<1x64xf32> to vector<64x64xf32>
    %5 = arith.addf %2, %4 : vector<64x64xf32>
    %cst_5 = arith.constant 0.000000e+00 : f32
    %6 = vector.broadcast %cst_5 : f32 to vector<64x64xf32>
    %7 = arith.maximumf %5, %6 : vector<64x64xf32>
    %c0_6 = arith.constant 0 : index
    %c0_7 = arith.constant 0 : index
    %8 = vector.load %arg4[%c0_6, %c0_7] : memref<64x128xf32, #tpu.memory_space<vmem>>, vector<64x128xf32>
    %cst_8 = arith.constant dense<0.000000e+00> : vector<64x128xf32>
    %9 = tpu.matmul %7, %8, %cst_8 {dimension_numbers = #tpu.dot_dimension_numbers<[1], [0], [0], [1], [0, 0, 1, 1], [], []>} : vector<64x64xf32>, vector<64x128xf32>, vector<64x128xf32> -> vector<64x128xf32>
    %c0_9 = arith.constant 0 : index
    %c0_10 = arith.constant 0 : index
    %10 = vector.load %arg5[%c0_9, %c0_10] : memref<1x128xf32, #tpu.memory_space<vmem>>, vector<1x128xf32>
    %11 = vector.broadcast %10 : vector<1x128xf32> to vector<64x128xf32>
    %12 = arith.addf %9, %11 : vector<64x128xf32>
    %cst_11 = arith.constant 0.000000e+00 : f32
    %13 = vector.broadcast %cst_11 : f32 to vector<64x128xf32>
    %14 = arith.maximumf %12, %13 : vector<64x128xf32>
    %15 = math.absf %12 : vector<64x128xf32>
    %cst_12 = arith.constant 0.000000e+00 : f32
    %16 = vector.broadcast %cst_12 : f32 to vector<64x128xf32>
    %17 = arith.subf %16, %15 : vector<64x128xf32>
    %18 = math.exp %17 : vector<64x128xf32>
    %19 = math.log1p %18 : vector<64x128xf32>
    %20 = arith.addf %14, %19 : vector<64x128xf32>
    %c0_13 = arith.constant 0 : index
    %c0_14 = arith.constant 0 : index
    %21 = vector.load %arg6[%c0_13, %c0_14] : memref<64x128xf32, #tpu.memory_space<vmem>>, vector<64x128xf32>
    tpu.vector_store %arg6[%c0_13, %c0_14], %20 {strides = array<i32>} : memref<64x128xf32, #tpu.memory_space<vmem>>, vector<64x128xf32>,
    return
  }
  func.func @transform_0(%arg0: i32) -> (i32, i32) {
    %c0_i32 = arith.constant 0 : i32
    %c0_i32_0 = arith.constant 0 : i32
    return %arg0, %c0_i32 : i32, i32
  }
  func.func @transform_1(%arg0: i32) -> (i32, i32) {
    %c0_i32 = arith.constant 0 : i32
    %c0_i32_0 = arith.constant 0 : i32
    %c0_i32_1 = arith.constant 0 : i32
    return %c0_i32, %c0_i32_0 : i32, i32
  }
  func.func @transform_2(%arg0: i32) -> (i32, i32) {
    %c0_i32 = arith.constant 0 : i32
    %c0_i32_0 = arith.constant 0 : i32
    %c0_i32_1 = arith.constant 0 : i32
    return %c0_i32, %c0_i32_0 : i32, i32
  }
  func.func @transform_3(%arg0: i32) -> (i32, i32) {
    %c0_i32 = arith.constant 0 : i32
    %c0_i32_0 = arith.constant 0 : i32
    %c0_i32_1 = arith.constant 0 : i32
    return %c0_i32, %c0_i32_0 : i32, i32
  }
  func.func @transform_4(%arg0: i32) -> (i32, i32) {
    %c0_i32 = arith.constant 0 : i32
    %c0_i32_0 = arith.constant 0 : i32
    %c0_i32_1 = arith.constant 0 : i32
    return %c0_i32, %c0_i32_0 : i32, i32
  }
  func.func @transform_5(%arg0: i32) -> (i32, i32) {
    %c0_i32 = arith.constant 0 : i32
    %c0_i32_0 = arith.constant 0 : i32
    return %arg0, %c0_i32 : i32, i32
  }
}

</mosaic_0001>

<llo_original>
// kernel: tpu_custom_call.1
$region0: #{tpu_custom_call.1}
  #allocation0 [shape = 'u32[]', space=smem, size = 0x4, offset = 0x4, fixed_abs, tag = 'smem constant byte address 0x4 - core index']
  #allocation1 [shape = 'u32[144,128]{1,0:T(1,128)}', space=vmem, size = 0x12000, scoped, tag = 'internal scratch']
  %s0 = inlined_call_operand.vmem [shape: f32[128,96], index: 0, kind: input, shape index: {}]
  %s1 = inlined_call_operand.vmem [shape: f32[96,64], index: 1, kind: input, shape index: {}]
  %s2 = inlined_call_operand.vmem [shape: f32[1,64], index: 2, kind: input, shape index: {}]
  %s3 = inlined_call_operand.vmem [shape: f32[64,128], index: 3, kind: input, shape index: {}]
  %s4 = inlined_call_operand.vmem [shape: f32[1,128], index: 4, kind: input, shape index: {}]
  %s5 = inlined_call_operand.hbm [shape: f32[128,128], index: 5, kind: output, shape index: {}]
  %s6 = sld [smem:[#allocation0]]
  $region53: #{tpu_custom_call.1} parent=0
    _
  %s8 = ssub.s32 1, %s6
  %s9 = scalar_select 0, %s8, %s6
  $region1: #{tpu_custom_call.1} parent=0
    #allocation2 [shape = 'u8[65536]{0}', space=vmem, size = 0x10000, scoped, tag = 'output window, operand 0']
    #allocation3 [shape = 's32[2]{0}', space=sflag, size = 0x8, scoped, tag = 'scoped memory for tpu_custom_call.1']
    %10 = vsyncpa [#allocation3], 0
    %s11 = scalar_lea.sflag [#allocation3], 1
    %12 = vsyncpa %s11, 0
    loop: start=0, step=1, limit=4
    $region2: #{tpu_custom_call.1} parent=1 // loop_pre_header
      _
    $region3: #{tpu_custom_call.1} parent=1 // loop_header
      %s14 = sphi 0, %s18
      %p15 = scmp.ge.s32.totalorder %s14, 4
      %s24 = sphi 0, %s26
      %s27 = sphi 0, %s24
      %s28 = sphi 0, %s27
      %s44 = sphi 0, %s28
      %s48 = sphi 0, %s48
      %s50 = sphi 0, %s48
      %s51 = sphi 0, %s50
      %s65 = sphi 0, %s51
      %s69 = sphi 0, %s69
      %s71 = sphi 0, %s69
      %s72 = sphi 0, %s71
      %s86 = sphi 0, %s72
      %s90 = sphi 0, %s90
      %s92 = sphi 0, %s90
      %s93 = sphi 0, %s92
      %s107 = sphi 0, %s93
      %s111 = sphi 0, %s111
      %s113 = sphi 0, %s111
      %s114 = sphi 0, %s113
      %s128 = sphi 0, %s114
      %s134 = sphi 0, %s136
      %s137 = sphi 0, %s134
      %s138 = sphi 0, %s137
      %s154 = sphi 0, %s138
    $region4: #{tpu_custom_call.1} parent=1 // loop_header_branch
      %17 = sbr.rel (%p15) target = $region8
    $region5: #{tpu_custom_call.1} parent=1 // loop_body
      %s19 = ssub.s32 %s14, 1
      %s20 = ssub.s32 %s14, 2
      %s21 = sadd.s32 %s14, 1
      %s22 = ssub.s32 %s14, %s21
      %p23 = scmp.eq.s32.totalorder %s22, 0
      %s25 = sadd.s32 %s24, 1
      %s26 = scalar_select %p23, %s24, %s25
      %p29 = pneg %p23
      %p30 = scmp.eq.s32.totalorder %s14, 1
      %p31 = por %p29, %p30
      %p32 = scmp.ne.s32.totalorder %s24, %s27
      %p33 = scmp.eq.s32.totalorder %s14, 0
      %p34 = por %p32, %p33
      %p35 = scmp.ne.s32.totalorder %s24, %s27
      %p36 = scmp.eq.s32.totalorder %s19, 1
      %p37 = por %p35, %p36
      %p38 = scmp.ne.s32.totalorder %s27, %s28
      %p39 = scmp.eq.s32.totalorder %s19, 0
      %p40 = por %p38, %p39
      %p41 = scmp.ne.s32.totalorder %s27, %s28
      %p42 = scmp.eq.s32.totalorder %s20, 1
      %p43 = por %p41, %p42
      %p45 = scmp.ne.s32.totalorder %s28, %s44
      %p46 = scmp.eq.s32.totalorder %s20, 0
      %p47 = por %p45, %p46
      %s49 = sadd.s32 %s48, 1
      %p52 = scmp.eq.s32.totalorder %s14, 1
      %p53 = scmp.ne.s32.totalorder %s48, %s50
      %p54 = scmp.eq.s32.totalorder %s14, 0
      %p55 = por %p53, %p54
      %p56 = scmp.ne.s32.totalorder %s48, %s50
      %p57 = scmp.eq.s32.totalorder %s19, 1
      %p58 = por %p56, %p57
      %p59 = scmp.ne.s32.totalorder %s50, %s51
      %p60 = scmp.eq.s32.totalorder %s19, 0
      %p61 = por %p59, %p60
      %p62 = scmp.ne.s32.totalorder %s50, %s51
      %p63 = scmp.eq.s32.totalorder %s20, 1
      %p64 = por %p62, %p63
      %p66 = scmp.ne.s32.totalorder %s51, %s65
      %p67 = scmp.eq.s32.totalorder %s20, 0
      %p68 = por %p66, %p67
      %s70 = sadd.s32 %s69, 1
      %p73 = scmp.eq.s32.totalorder %s14, 1
      %p74 = scmp.ne.s32.totalorder %s69, %s71
      %p75 = scmp.eq.s32.totalorder %s14, 0
      %p76 = por %p74, %p75
      %p77 = scmp.ne.s32.totalorder %s69, %s71
      %p78 = scmp.eq.s32.totalorder %s19, 1
      %p79 = por %p77, %p78
      %p80 = scmp.ne.s32.totalorder %s71, %s72
      %p81 = scmp.eq.s32.totalorder %s19, 0
      %p82 = por %p80, %p81
      %p83 = scmp.ne.s32.totalorder %s71, %s72
      %p84 = scmp.eq.s32.totalorder %s20, 1
      %p85 = por %p83, %p84
      %p87 = scmp.ne.s32.totalorder %s72, %s86
      %p88 = scmp.eq.s32.totalorder %s20, 0
      %p89 = por %p87, %p88
      %s91 = sadd.s32 %s90, 1
      %p94 = scmp.eq.s32.totalorder %s14, 1
      %p95 = scmp.ne.s32.totalorder %s90, %s92
      %p96 = scmp.eq.s32.totalorder %s14, 0
      %p97 = por %p95, %p96
      %p98 = scmp.ne.s32.totalorder %s90, %s92
      %p99 = scmp.eq.s32.totalorder %s19, 1
      %p100 = por %p98, %p99
      %p101 = scmp.ne.s32.totalorder %s92, %s93
      %p102 = scmp.eq.s32.totalorder %s19, 0
      %p103 = por %p101, %p102
      %p104 = scmp.ne.s32.totalorder %s92, %s93
      %p105 = scmp.eq.s32.totalorder %s20, 1
      %p106 = por %p104, %p105
      %p108 = scmp.ne.s32.totalorder %s93, %s107
      %p109 = scmp.eq.s32.totalorder %s20, 0
      %p110 = por %p108, %p109
      %s112 = sadd.s32 %s111, 1
      %p115 = scmp.eq.s32.totalorder %s14, 1
      %p116 = scmp.ne.s32.totalorder %s111, %s113
      %p117 = scmp.eq.s32.totalorder %s14, 0
      %p118 = por %p116, %p117
      %p119 = scmp.ne.s32.totalorder %s111, %s113
      %p120 = scmp.eq.s32.totalorder %s19, 1
      %p121 = por %p119, %p120
      %p122 = scmp.ne.s32.totalorder %s113, %s114
      %p123 = scmp.eq.s32.totalorder %s19, 0
      %p124 = por %p122, %p123
      %p125 = scmp.ne.s32.totalorder %s113, %s114
      %p126 = scmp.eq.s32.totalorder %s20, 1
      %p127 = por %p125, %p126
      %p129 = scmp.ne.s32.totalorder %s114, %s128
      %p130 = scmp.eq.s32.totalorder %s20, 0
      %p131 = por %p129, %p130
      %s132 = ssub.s32 %s14, %s21
      %p133 = scmp.eq.s32.totalorder %s132, 0
      %s135 = sadd.s32 %s134, 1
      %s136 = scalar_select %p133, %s134, %s135
      %p139 = pneg %p133
      %p140 = scmp.eq.s32.totalorder %s14, 1
      %p141 = por %p139, %p140
      %p142 = scmp.ne.s32.totalorder %s134, %s137
      %p143 = scmp.eq.s32.totalorder %s14, 0
      %p144 = por %p142, %p143
      %p145 = scmp.ne.s32.totalorder %s134, %s137
      %p146 = scmp.eq.s32.totalorder %s19, 1
      %p147 = por %p145, %p146
      %p148 = scmp.ne.s32.totalorder %s137, %s138
      %p149 = scmp.eq.s32.totalorder %s19, 0
      %p150 = por %p148, %p149
      %p151 = scmp.ne.s32.totalorder %s137, %s138
      %p152 = scmp.eq.s32.totalorder %s20, 1
      %p153 = por %p151, %p152
      %p155 = scmp.ne.s32.totalorder %s138, %s154
      %p156 = scmp.eq.s32.totalorder %s20, 0
      %p157 = por %p155, %p156
      %p158 = scmp.le.s32.totalorder 1, %s14
      %p159 = scmp.lt.s32.totalorder %s14, 3
      %p160 = pnand %p158, %p159
      %p161 = pneg %p160
      // Predicated region
      $region9: #{tpu_custom_call.1} parent=5 // pred_check
        _
      $region10: #{tpu_custom_call.1} parent=5 // pred_check_branch
        %163 = sbr.rel (%p160) target = $region12
      $region11: #{tpu_custom_call.1} parent=5 // pred_region
        %s164 = ssub.s32 %s14, 1
        // Predicated region
        $region13: #{tpu_custom_call.1} parent=11 // pred_check
          %p165 = pneg %p61
        $region14: #{tpu_custom_call.1} parent=11 // pred_check_branch
          %167 = sbr.rel (%p165) target = $region16
        $region15: #{tpu_custom_call.1} parent=11 // pred_region
          _
        $region16: #{tpu_custom_call.1} parent=11 // pred_fallthru
          _
        // Predicated region
        $region17: #{tpu_custom_call.1} parent=11 // pred_check
          %p168 = pneg %p82
        $region18: #{tpu_custom_call.1} parent=11 // pred_check_branch
          %170 = sbr.rel (%p168) target = $region20
        $region19: #{tpu_custom_call.1} parent=11 // pred_region
          _
        $region20: #{tpu_custom_call.1} parent=11 // pred_fallthru
          _
        // Predicated region
        $region21: #{tpu_custom_call.1} parent=11 // pred_check
          %p171 = pneg %p103
        $region22: #{tpu_custom_call.1} parent=11 // pred_check_branch
          %173 = sbr.rel (%p171) target = $region24
        $region23: #{tpu_custom_call.1} parent=11 // pred_region
          _
        $region24: #{tpu_custom_call.1} parent=11 // pred_fallthru
          _
        // Predicated region
        $region25: #{tpu_custom_call.1} parent=11 // pred_check
          %p174 = pneg %p124
        $region26: #{tpu_custom_call.1} parent=11 // pred_check_branch
          %176 = sbr.rel (%p174) target = $region28
        $region27: #{tpu_custom_call.1} parent=11 // pred_region
          _
        $region28: #{tpu_custom_call.1} parent=11 // pred_fallthru
          _
      $region12: #{tpu_custom_call.1} parent=5 // pred_fallthru
        _
      %p177 = scmp.lt.s32.totalorder %s14, 2
      // Predicated region
      $region29: #{tpu_custom_call.1} parent=5 // pred_check
        %p178 = pneg %p177
      $region30: #{tpu_custom_call.1} parent=5 // pred_check_branch
        %180 = sbr.rel (%p178) target = $region32
      $region31: #{tpu_custom_call.1} parent=5 // pred_region
        // Predicated region
        $region33: #{tpu_custom_call.1} parent=31 // pred_check
          %p181 = pneg %p34
        $region34: #{tpu_custom_call.1} parent=31 // pred_check_branch
          %183 = sbr.rel (%p181) target = $region36
        $region35: #{tpu_custom_call.1} parent=31 // pred_region
          %s184 = smul.u32 8, %s14
          %p185 = scmp.lt.s32.totalorder %s184, 15
          %s186 = scalar_select %p185, %s184, 15
          %s187 = smul.addr %s186, 8
          %s188 = scalar_lea.vmem %s0, %s187
          %s189 = smul.u32 8, %s14
        $region36: #{tpu_custom_call.1} parent=31 // pred_fallthru
          _
      $region32: #{tpu_custom_call.1} parent=5 // pred_fallthru
        _
      %p190 = scmp.le.s32.totalorder 1, %s14
      %p191 = scmp.lt.s32.totalorder %s14, 3
      %p192 = pnand %p190, %p191
      %p193 = pneg %p192
      // Predicated region
      $region37: #{tpu_custom_call.1} parent=5 // pred_check
        _
      $region38: #{tpu_custom_call.1} parent=5 // pred_check_branch
        %195 = sbr.rel (%p192) target = $region40
      $region39: #{tpu_custom_call.1} parent=5 // pred_region
        %s196 = ssub.s32 %s14, 1
        %s197 = smul.u32 8, %s19
        %p198 = scmp.lt.s32.totalorder %s197, 15
        %s199 = scalar_select %p198, %s197, 15
        %s200 = smul.addr %s199, 8
        %s201 = scalar_lea.vmem %s0, %s200
        %p202 = pneg %p40
        %p203 = pneg %p37
        %p204 = pneg %p61
        %p205 = pneg %p58
        %p206 = pneg %p82
        %p207 = pneg %p79
        %p208 = pneg %p103
        %p209 = pneg %p100
        %p210 = pneg %p124
        %p211 = pneg %p121
        %p212 = pneg %p150
        %p213 = pneg %p147
        %s214 = sand.u32 %s137, 1
        %s215 = scalar_lea.sflag [#allocation3], %s214
        %s216 = sand.u32 %s137, 1
        %s217 = smul.addr %s216, 64
        %s218 = scalar_lea.vmem [#allocation2], %s217
        %s219 = smul.u32 8, %s19
        %p220 = scmp.lt.s32.totalorder %s219, 15
        %s221 = scalar_select %p220, %s219, 15
        %s222 = smul.addr %s221, 8
        %s223 = scalar_lea.vmem %s0, %s222
        %s224 = smul.u32 8, %s19
        %s225 = smul.u32 8, %s19
        %v226 = vld [vmem:[%s223] sm:$0xff]
        %v227 = vld [vmem:[%s223 + $0x8] sm:$0xff]
        %v228 = vld [vmem:[%s223 + $0x10] sm:$0xff]
        %v229 = vld [vmem:[%s223 + $0x18] sm:$0xff]
        %v230 = vld [vmem:[%s223 + $0x20] sm:$0xff]
        %v231 = vld [vmem:[%s223 + $0x28] sm:$0xff]
        %v232 = vld [vmem:[%s223 + $0x30] sm:$0xff]
        %v233 = vld [vmem:[%s223 + $0x38] sm:$0xff]
        %v234 = vld [vmem:[%s1] sm:$0xff]
        %v235 = vld [vmem:[%s1 + $0x8] sm:$0xff]
        %v236 = vld [vmem:[%s1 + $0x10] sm:$0xff]
        %v237 = vld [vmem:[%s1 + $0x18] sm:$0xff]
        %v238 = vld [vmem:[%s1 + $0x20] sm:$0xff]
        %v239 = vld [vmem:[%s1 + $0x28] sm:$0xff]
        %v240 = vld [vmem:[%s1 + $0x30] sm:$0xff]
        %v241 = vld [vmem:[%s1 + $0x38] sm:$0xff]
        %v242 = vld [vmem:[%s1 + $0x40] sm:$0xff]
        %v243 = vld [vmem:[%s1 + $0x48] sm:$0xff]
        %v244 = vld [vmem:[%s1 + $0x50] sm:$0xff]
        %v245 = vld [vmem:[%s1 + $0x58] sm:$0xff]
        %v246 = vld [vmem:[%s2] sm:$0x1]
        %v248 = vlaneseq
        %v249 = vshrl.u32 %v248, 7
        %v250 = vsub.s32 0, %v249
        %v251 = vrot.slane %v246, %v250
        %vm253 = vcmask 785408
        %v255 = vsel %vm253, %v226, 0
        %v258 = vsel %vm253, %v227, 0
        %v261 = vsel %vm253, %v228, 0
        %v264 = vsel %vm253, %v229, 0
        %v267 = vsel %vm253, %v230, 0
        %v270 = vsel %vm253, %v231, 0
        %v273 = vsel %vm253, %v232, 0
        %v276 = vsel %vm253, %v233, 0
        %278 = vmatprep.subr.mxu0 0.0
        %279 = vmatpush1.msra.mxu0 %v234
        %280 = vmatprep.subr.mxu0 0.0
        %281 = vmatpush1.msra.mxu0 %v235
        %282 = vmatprep.subr.mxu0 0.0
        %283 = vmatpush1.msra.mxu0 %v236
        %284 = vmatprep.subr.mxu0 0.0
        %285 = vmatpush1.msra.mxu0 %v237
        %286 = vmatprep.subr.mxu0 0.0
        %287 = vmatpush1.msra.mxu0 %v238
        %288 = vmatprep.subr.mxu0 0.0
        %289 = vmatpush1.msra.mxu0 %v239
        %290 = vmatprep.subr.mxu0 0.0
        %291 = vmatpush1.msra.mxu0 %v240
        %292 = vmatprep.subr.mxu0 0.0
        %293 = vmatpush1.msra.mxu0 %v241
        %294 = vmatprep.subr.mxu0 0.0
        %295 = vmatpush1.msra.mxu0 %v242
        %296 = vmatprep.subr.mxu0 0.0
        %297 = vmatpush1.msra.mxu0 %v243
        %298 = vmatprep.subr.mxu0 0.0
        %299 = vmatpush1.msra.mxu0 %v244
        %300 = vmatprep.subr.mxu0 0.0
        %301 = vmatpush1.msra.mxu0 %v245
        %302 = vmatprep.subr.mxu0 0.0
        %303 = vmatpush1.msra.mxu0 0.0
        %304 = vmatprep.subr.mxu0 0.0
        %305 = vmatpush1.msra.mxu0 0.0
        %306 = vmatprep.subr.mxu0 0.0
        %307 = vmatpush1.msra.mxu0 0.0
        %308 = vmatprep.subr.mxu0 0.0
        %309 = vmatpush1.msra.mxu0 0.0
        %310 = vmatprep.subr.mxu0 0.0
        %311 = vmatpush1.msra.mxu0 0.0
        %312 = vmatprep.subr.mxu0 0.0
        %313 = vmatpush1.msra.mxu0 0.0
        %314 = vmatprep.subr.mxu0 0.0
        %315 = vmatpush1.msra.mxu0 0.0
        %316 = vmatprep.subr.mxu0 0.0
        %317 = vmatpush1.msra.mxu0 0.0
        %318 = vmatprep.subr.mxu0 0.0
        %319 = vmatpush1.msra.mxu0 0.0
        %320 = vmatprep.subr.mxu0 0.0
        %321 = vmatpush1.msra.mxu0 0.0
        %322 = vmatprep.subr.mxu0 0.0
        %323 = vmatpush1.msra.mxu0 0.0
        %324 = vmatprep.subr.mxu0 0.0
        %325 = vmatpush1.msra.mxu0 0.0
        %326 = vmatprep.subr.mxu0 0.0
        %327 = vmatpush1.msra.mxu0 0.0
        %328 = vmatprep.subr.mxu0 0.0
        %329 = vmatpush1.msra.mxu0 0.0
        %330 = vmatprep.subr.mxu0 0.0
        %331 = vmatpush1.msra.mxu0 0.0
        %332 = vmatprep.subr.mxu0 0.0
        %333 = vmatpush1.msra.mxu0 0.0
        %334 = vmatprep.subr.mxu0 0.0
        %335 = vmatpush1.msra.mxu0 0.0
        %336 = vmatprep.subr.mxu0 0.0
        %337 = vmatpush1.msra.mxu0 0.0
        %338 = vmatprep.subr.mxu0 0.0
        %339 = vmatpush1.msra.mxu0 0.0
        %340 = vmatprep.subr.mxu0 0.0
        %341 = vmatpush1.msra.mxu0 0.0
        %342 = vmatprep.mubr.f32.mxu0 0.0
        %343 = vmatmul.mubr.f32.gmra.mrb[0].mxu0 %v255
        %v344 = vpop.f32.mrb[0].mxu0
        %v345 = vadd.f32 %v251, %v344
        %v346 = vpop.f32.mrb[0].mxu0
        %347 = vmatprep.mubr.f32.mxu0 0.0
        %348 = vmatmul.mubr.f32.gmra.mrb[0].mxu0 %v258
        %v349 = vpop.f32.mrb[0].mxu0
        %v350 = vadd.f32 %v251, %v349
        %v351 = vpop.f32.mrb[0].mxu0
        %352 = vmatprep.mubr.f32.mxu0 0.0
        %353 = vmatmul.mubr.f32.gmra.mrb[0].mxu0 %v261
        %v354 = vpop.f32.mrb[0].mxu0
        %v355 = vadd.f32 %v251, %v354
        %v356 = vpop.f32.mrb[0].mxu0
        %357 = vmatprep.mubr.f32.mxu0 0.0
        %358 = vmatmul.mubr.f32.gmra.mrb[0].mxu0 %v264
        %v359 = vpop.f32.mrb[0].mxu0
        %v360 = vadd.f32 %v251, %v359
        %v361 = vpop.f32.mrb[0].mxu0
        %362 = vmatprep.mubr.f32.mxu0 0.0
        %363 = vmatmul.mubr.f32.gmra.mrb[0].mxu0 %v267
        %v364 = vpop.f32.mrb[0].mxu0
        %v365 = vadd.f32 %v251, %v364
        %v366 = vpop.f32.mrb[0].mxu0
        %367 = vmatprep.mubr.f32.mxu0 0.0
        %368 = vmatmul.mubr.f32.gmra.mrb[0].mxu0 %v270
        %v369 = vpop.f32.mrb[0].mxu0
        %v370 = vadd.f32 %v251, %v369
        %v371 = vpop.f32.mrb[0].mxu0
        %372 = vmatprep.mubr.f32.mxu0 0.0
        %373 = vmatmul.mubr.f32.gmra.mrb[0].mxu0 %v273
        %v374 = vpop.f32.mrb[0].mxu0
        %v375 = vadd.f32 %v251, %v374
        %v376 = vpop.f32.mrb[0].mxu0
        %377 = vmatprep.mubr.f32.mxu0 0.0
        %378 = vmatmul.mubr.f32.gmra.mrb[0].mxu0 %v276
        %v379 = vpop.f32.mrb[0].mxu0
        %v380 = vadd.f32 %v251, %v379
        %v381 = vpop.f32.mrb[0].mxu0
        %382 = vdwg.mxu0
        %v383 = vmax.f32 %v345, 0.0
        %v384 = vmax.f32 %v350, 0.0
        %v385 = vmax.f32 %v355, 0.0
        %v386 = vmax.f32 %v360, 0.0
        %v387 = vmax.f32 %v365, 0.0
        %v388 = vmax.f32 %v370, 0.0
        %v389 = vmax.f32 %v375, 0.0
        %v390 = vmax.f32 %v380, 0.0
        %v391 = vld [vmem:[%s3] sm:$0xff]
        %v392 = vld [vmem:[%s3 + $0x8] sm:$0xff]
        %v393 = vld [vmem:[%s3 + $0x10] sm:$0xff]
        %v394 = vld [vmem:[%s3 + $0x18] sm:$0xff]
        %v395 = vld [vmem:[%s3 + $0x20] sm:$0xff]
        %v396 = vld [vmem:[%s3 + $0x28] sm:$0xff]
        %v397 = vld [vmem:[%s3 + $0x30] sm:$0xff]
        %v398 = vld [vmem:[%s3 + $0x38] sm:$0xff]
        %v399 = vld [vmem:[%s4] sm:$0x1]
        %v401 = vlaneseq
        %v402 = vshrl.u32 %v401, 7
        %v403 = vsub.s32 0, %v402
        %v404 = vrot.slane %v399, %v403
        %vm406 = vcmask 523264
        %v408 = vsel %vm406, %v383, 0
        %v411 = vsel %vm406, %v384, 0
        %v414 = vsel %vm406, %v385, 0
        %v417 = vsel %vm406, %v386, 0
        %v420 = vsel %vm406, %v387, 0
        %v423 = vsel %vm406, %v388, 0
        %v426 = vsel %vm406, %v389, 0
        %v429 = vsel %vm406, %v390, 0
        %431 = vmatprep.subr.mxu0 0.0
        %432 = vmatpush1.msra.mxu0 %v391
        %433 = vmatprep.subr.mxu0 0.0
        %434 = vmatpush1.msra.mxu0 %v392
        %435 = vmatprep.subr.mxu0 0.0
        %436 = vmatpush1.msra.mxu0 %v393
        %437 = vmatprep.subr.mxu0 0.0
        %438 = vmatpush1.msra.mxu0 %v394
        %439 = vmatprep.subr.mxu0 0.0
        %440 = vmatpush1.msra.mxu0 %v395
        %441 = vmatprep.subr.mxu0 0.0
        %442 = vmatpush1.msra.mxu0 %v396
        %443 = vmatprep.subr.mxu0 0.0
        %444 = vmatpush1.msra.mxu0 %v397
        %445 = vmatprep.subr.mxu0 0.0
        %446 = vmatpush1.msra.mxu0 %v398
        %447 = vmatprep.subr.mxu0 0.0
        %448 = vmatpush1.msra.mxu0 0.0
        %449 = vmatprep.subr.mxu0 0.0
        %450 = vmatpush1.msra.mxu0 0.0
        %451 = vmatprep.subr.mxu0 0.0
        %452 = vmatpush1.msra.mxu0 0.0
        %453 = vmatprep.subr.mxu0 0.0
        %454 = vmatpush1.msra.mxu0 0.0
        %455 = vmatprep.subr.mxu0 0.0
        %456 = vmatpush1.msra.mxu0 0.0
        %457 = vmatprep.subr.mxu0 0.0
        %458 = vmatpush1.msra.mxu0 0.0
        %459 = vmatprep.subr.mxu0 0.0
        %460 = vmatpush1.msra.mxu0 0.0
        %461 = vmatprep.subr.mxu0 0.0
        %462 = vmatpush1.msra.mxu0 0.0
        %463 = vmatprep.subr.mxu0 0.0
        %464 = vmatpush1.msra.mxu0 0.0
        %465 = vmatprep.subr.mxu0 0.0
        %466 = vmatpush1.msra.mxu0 0.0
        %467 = vmatprep.subr.mxu0 0.0
        %468 = vmatpush1.msra.mxu0 0.0
        %469 = vmatprep.subr.mxu0 0.0
        %470 = vmatpush1.msra.mxu0 0.0
        %471 = vmatprep.subr.mxu0 0.0
        %472 = vmatpush1.msra.mxu0 0.0
        %473 = vmatprep.subr.mxu0 0.0
        %474 = vmatpush1.msra.mxu0 0.0
        %475 = vmatprep.subr.mxu0 0.0
        %476 = vmatpush1.msra.mxu0 0.0
        %477 = vmatprep.subr.mxu0 0.0
        %478 = vmatpush1.msra.mxu0 0.0
        %479 = vmatprep.subr.mxu0 0.0
        %480 = vmatpush1.msra.mxu0 0.0
        %481 = vmatprep.subr.mxu0 0.0
        %482 = vmatpush1.msra.mxu0 0.0
        %483 = vmatprep.subr.mxu0 0.0
        %484 = vmatpush1.msra.mxu0 0.0
        %485 = vmatprep.subr.mxu0 0.0
        %486 = vmatpush1.msra.mxu0 0.0
        %487 = vmatprep.subr.mxu0 0.0
        %488 = vmatpush1.msra.mxu0 0.0
        %489 = vmatprep.subr.mxu0 0.0
        %490 = vmatpush1.msra.mxu0 0.0
        %491 = vmatprep.subr.mxu0 0.0
        %492 = vmatpush1.msra.mxu0 0.0
        %493 = vmatprep.subr.mxu0 0.0
        %494 = vmatpush1.msra.mxu0 0.0
        %495 = vmatprep.mubr.f32.mxu0 0.0
        %496 = vmatmul.mubr.f32.gmra.mrb[0].mxu0 %v408
        %v497 = vpop.f32.mrb[0].mxu0
        %v498 = vadd.f32 %v404, %v497
        %v499 = vpop.f32.mrb[0].mxu0
        %500 = vmatprep.mubr.f32.mxu0 0.0
        %501 = vmatmul.mubr.f32.gmra.mrb[0].mxu0 %v411
        %v502 = vpop.f32.mrb[0].mxu0
        %v503 = vadd.f32 %v404, %v502
        %v504 = vpop.f32.mrb[0].mxu0
        %505 = vmatprep.mubr.f32.mxu0 0.0
        %506 = vmatmul.mubr.f32.gmra.mrb[0].mxu0 %v414
        %v507 = vpop.f32.mrb[0].mxu0
        %v508 = vadd.f32 %v404, %v507
        %v509 = vpop.f32.mrb[0].mxu0
        %510 = vmatprep.mubr.f32.mxu0 0.0
        %511 = vmatmul.mubr.f32.gmra.mrb[0].mxu0 %v417
        %v512 = vpop.f32.mrb[0].mxu0
        %v513 = vadd.f32 %v404, %v512
        %v514 = vpop.f32.mrb[0].mxu0
        %515 = vmatprep.mubr.f32.mxu0 0.0
        %516 = vmatmul.mubr.f32.gmra.mrb[0].mxu0 %v420
        %v517 = vpop.f32.mrb[0].mxu0
        %v518 = vadd.f32 %v404, %v517
        %v519 = vpop.f32.mrb[0].mxu0
        %520 = vmatprep.mubr.f32.mxu0 0.0
        %521 = vmatmul.mubr.f32.gmra.mrb[0].mxu0 %v423
        %v522 = vpop.f32.mrb[0].mxu0
        %v523 = vadd.f32 %v404, %v522
        %v524 = vpop.f32.mrb[0].mxu0
        %525 = vmatprep.mubr.f32.mxu0 0.0
        %526 = vmatmul.mubr.f32.gmra.mrb[0].mxu0 %v426
        %v527 = vpop.f32.mrb[0].mxu0
        %v528 = vadd.f32 %v404, %v527
        %v529 = vpop.f32.mrb[0].mxu0
        %530 = vmatprep.mubr.f32.mxu0 0.0
        %531 = vmatmul.mubr.f32.gmra.mrb[0].mxu0 %v429
        %v532 = vpop.f32.mrb[0].mxu0
        %v533 = vadd.f32 %v404, %v532
        %v534 = vpop.f32.mrb[0].mxu0
        %535 = vdwg.mxu0
        %v536 = vmax.f32 %v498, 0.0
        %v537 = vmax.f32 %v503, 0.0
        %v538 = vmax.f32 %v508, 0.0
        %v539 = vmax.f32 %v513, 0.0
        %v540 = vmax.f32 %v518, 0.0
        %v541 = vmax.f32 %v523, 0.0
        %v542 = vmax.f32 %v528, 0.0
        %v543 = vmax.f32 %v533, 0.0
        %v544 = vand.u32 2147483647, %v498
        %v545 = vand.u32 2147483647, %v503
        %v546 = vand.u32 2147483647, %v508
        %v547 = vand.u32 2147483647, %v513
        %v548 = vand.u32 2147483647, %v518
        %v549 = vand.u32 2147483647, %v523
        %v550 = vand.u32 2147483647, %v528
        %v551 = vand.u32 2147483647, %v533
        %v552 = vsub.f32 0.0, %v544
        %v553 = vsub.f32 0.0, %v545
        %v554 = vsub.f32 0.0, %v546
        %v555 = vsub.f32 0.0, %v547
        %v556 = vsub.f32 0.0, %v548
        %v557 = vsub.f32 0.0, %v549
        %v558 = vsub.f32 0.0, %v550
        %v559 = vsub.f32 0.0, %v551
        %v560 = vmul.f32 %v552, 1.442695
        %v561 = vpow.pop %v560
        %v562 = vmul.f32 %v553, 1.442695
        %v563 = vpow.pop %v562
        %v564 = vmul.f32 %v554, 1.442695
        %v565 = vpow.pop %v564
        %v566 = vmul.f32 %v555, 1.442695
        %v567 = vpow.pop %v566
        %v568 = vmul.f32 %v556, 1.442695
        %v569 = vpow.pop %v568
        %v570 = vmul.f32 %v557, 1.442695
        %v571 = vpow.pop %v570
        %v572 = vmul.f32 %v558, 1.442695
        %v573 = vpow.pop %v572
        %v574 = vmul.f32 %v559, 1.442695
        %v575 = vpow.pop %v574
        %v576 = vadd.f32 %v561, 1.0
        %v577 = vlog2.pop %v576
        %v578 = vmul.f32 %v577, 0.6931472
        %v579 = vmul.f32 -0.5, %v561
        %v580 = vadd.f32 %v579, 1.0
        %v581 = vmul.f32 %v580, %v561
        %v582 = vand.u32 2147483647, %v561
        %vm583 = vcmp.lt.f32.partialorder %v582, 0.0004427343
        %v584 = vsel %vm583, %v581, %v578
        %v585 = vadd.f32 %v563, 1.0
        %v586 = vlog2.pop %v585
        %v587 = vmul.f32 %v586, 0.6931472
        %v588 = vmul.f32 -0.5, %v563
        %v589 = vadd.f32 %v588, 1.0
        %v590 = vmul.f32 %v589, %v563
        %v591 = vand.u32 2147483647, %v563
        %vm592 = vcmp.lt.f32.partialorder %v591, 0.0004427343
        %v593 = vsel %vm592, %v590, %v587
        %v594 = vadd.f32 %v565, 1.0
        %v595 = vlog2.pop %v594
        %v596 = vmul.f32 %v595, 0.6931472
        %v597 = vmul.f32 -0.5, %v565
        %v598 = vadd.f32 %v597, 1.0
        %v599 = vmul.f32 %v598, %v565
        %v600 = vand.u32 2147483647, %v565
        %vm601 = vcmp.lt.f32.partialorder %v600, 0.0004427343
        %v602 = vsel %vm601, %v599, %v596
        %v603 = vadd.f32 %v567, 1.0
        %v604 = vlog2.pop %v603
        %v605 = vmul.f32 %v604, 0.6931472
        %v606 = vmul.f32 -0.5, %v567
        %v607 = vadd.f32 %v606, 1.0
        %v608 = vmul.f32 %v607, %v567
        %v609 = vand.u32 2147483647, %v567
        %vm610 = vcmp.lt.f32.partialorder %v609, 0.0004427343
        %v611 = vsel %vm610, %v608, %v605
        %v612 = vadd.f32 %v569, 1.0
        %v613 = vlog2.pop %v612
        %v614 = vmul.f32 %v613, 0.6931472
        %v615 = vmul.f32 -0.5, %v569
        %v616 = vadd.f32 %v615, 1.0
        %v617 = vmul.f32 %v616, %v569
        %v618 = vand.u32 2147483647, %v569
        %vm619 = vcmp.lt.f32.partialorder %v618, 0.0004427343
        %v620 = vsel %vm619, %v617, %v614
        %v621 = vadd.f32 %v571, 1.0
        %v622 = vlog2.pop %v621
        %v623 = vmul.f32 %v622, 0.6931472
        %v624 = vmul.f32 -0.5, %v571
        %v625 = vadd.f32 %v624, 1.0
        %v626 = vmul.f32 %v625, %v571
        %v627 = vand.u32 2147483647, %v571
        %vm628 = vcmp.lt.f32.partialorder %v627, 0.0004427343
        %v629 = vsel %vm628, %v626, %v623
        %v630 = vadd.f32 %v573, 1.0
        %v631 = vlog2.pop %v630
        %v632 = vmul.f32 %v631, 0.6931472
        %v633 = vmul.f32 -0.5, %v573
        %v634 = vadd.f32 %v633, 1.0
        %v635 = vmul.f32 %v634, %v573
        %v636 = vand.u32 2147483647, %v573
        %vm637 = vcmp.lt.f32.partialorder %v636, 0.0004427343
        %v638 = vsel %vm637, %v635, %v632
        %v639 = vadd.f32 %v575, 1.0
        %v640 = vlog2.pop %v639
        %v641 = vmul.f32 %v640, 0.6931472
        %v642 = vmul.f32 -0.5, %v575
        %v643 = vadd.f32 %v642, 1.0
        %v644 = vmul.f32 %v643, %v575
        %v645 = vand.u32 2147483647, %v575
        %vm646 = vcmp.lt.f32.partialorder %v645, 0.0004427343
        %v647 = vsel %vm646, %v644, %v641
        %v648 = vadd.f32 %v536, %v584
        %v649 = vadd.f32 %v537, %v593
        %v650 = vadd.f32 %v538, %v602
        %v651 = vadd.f32 %v539, %v611
        %v652 = vadd.f32 %v540, %v620
        %v653 = vadd.f32 %v541, %v629
        %v654 = vadd.f32 %v542, %v638
        %v655 = vadd.f32 %v543, %v647
        %656 = vst [vmem:[%s218] sm:$0xff] %v648
        %657 = vst [vmem:[%s218 + $0x8] sm:$0xff] %v649
        %658 = vst [vmem:[%s218 + $0x10] sm:$0xff] %v650
        %659 = vst [vmem:[%s218 + $0x18] sm:$0xff] %v651
        %660 = vst [vmem:[%s218 + $0x20] sm:$0xff] %v652
        %661 = vst [vmem:[%s218 + $0x28] sm:$0xff] %v653
        %662 = vst [vmem:[%s218 + $0x30] sm:$0xff] %v654
        %663 = vst [vmem:[%s218 + $0x38] sm:$0xff] %v655
        %s664 = sand.u32 %s137, 1
        %s665 = scalar_lea.sflag [#allocation3], %s664
        %s666 = sand.u32 %s137, 1
        %s667 = smul.addr %s666, 64
        %s668 = scalar_lea.vmem [#allocation2], %s667
        // Predicated region
        $region41: #{tpu_custom_call.1} parent=39 // pred_check
          %p669 = pneg %p147
        $region42: #{tpu_custom_call.1} parent=39 // pred_check_branch
          %671 = sbr.rel (%p669) target = $region44
        $region43: #{tpu_custom_call.1} parent=39 // pred_region
          %s672 = smul.u32 8, %s19
          %s674 = ssub.s32 1024, 1024
          %675 = vsyncadd %s665, %s674
          %s676 = smul.addr %s672, 128
          %s677 = scalar_lea.hbm %s5, %s676
          %s678 = sshll.u32 %s668, 4
          %s679 = int_to_ptr.vmem [resolvable:$true] %s678
          %684 = dma.vmem_to_hbm [thread:$0]  %s679, 1024, %s677, %s665, 128, 128, 8
        $region44: #{tpu_custom_call.1} parent=39 // pred_fallthru
          _
      $region40: #{tpu_custom_call.1} parent=5 // pred_fallthru
        _
      %p685 = scmp.le.s32.totalorder 2, %s14
      // Predicated region
      $region45: #{tpu_custom_call.1} parent=5 // pred_check
        %p686 = pneg %p685
      $region46: #{tpu_custom_call.1} parent=5 // pred_check_branch
        %688 = sbr.rel (%p686) target = $region48
      $region47: #{tpu_custom_call.1} parent=5 // pred_region
        %s689 = ssub.s32 %s14, 2
        // Predicated region
        $region49: #{tpu_custom_call.1} parent=47 // pred_check
          %p690 = pneg %p153
        $region50: #{tpu_custom_call.1} parent=47 // pred_check_branch
          %692 = sbr.rel (%p690) target = $region52
        $region51: #{tpu_custom_call.1} parent=47 // pred_region
          %s693 = sand.u32 %s138, 1
          %s694 = scalar_lea.sflag [#allocation3], %s693
          %s695 = sand.u32 %s138, 1
          %s696 = smul.addr %s695, 64
          %s697 = scalar_lea.vmem [#allocation2], %s696
          %698 = dma.done %s694, 1024
        $region52: #{tpu_custom_call.1} parent=47 // pred_fallthru
          _
      $region48: #{tpu_custom_call.1} parent=5 // pred_fallthru
        _
    $region6: #{tpu_custom_call.1} parent=1 // loop_footer
      %s18 = sadd.s32 1, %s14
    $region7: #{tpu_custom_call.1} parent=1 // loop_footer_branch
      %13 = sbr.rel target = $region3
    $region8: #{tpu_custom_call.1} parent=1 // loop_exit
      _
    %699 = vsyncpa [#allocation3], 1
    %s700 = scalar_lea.sflag [#allocation3], 1
    %701 = vsyncpa %s700, 1

</llo_original>
